<compile_context>
chip_gen: v6e
topology: v6e:2x2x1
jax: 0.10.0
libtpu: 0.0.40
codegen_flags: <defaults>
</compile_context>

<pallas_src>
import functools
import math

import jax
import jax.numpy as jnp
from jax.experimental import pallas as pl
from jax.experimental.pallas import tpu as pltpu


def _self_attn_kernel(x_ref, wqkv_ref, cls_w_ref, cls_b_ref, o_ref, *, d):
    bblk, seq, din = x_ref.shape

    # Fused QKV projection: one (Bblk*L, Din) x (Din, 3D) matmul, bf16 in / f32 acc.
    x2d = x_ref[...].reshape(bblk * seq, din)
    qkv = jnp.dot(x2d, wqkv_ref[...], preferred_element_type=jnp.float32)
    qkv = qkv.reshape(bblk, seq, 3 * d)
    # 1/sqrt(D) is pre-folded into WQ on the host side, so q arrives scaled.
    q = qkv[:, :, 0 * d:1 * d].astype(jnp.bfloat16)
    k = qkv[:, :, 1 * d:2 * d].astype(jnp.bfloat16)
    v = qkv[:, :, 2 * d:3 * d].astype(jnp.bfloat16)

    # attention_score = softmax(Q K^T / sqrt(D)); batched contraction on the last
    # dims (no explicit K transpose), bf16 MXU inputs, f32 accumulation.
    s = jnp.einsum('bqd,bkd->bqk', q, k,
                   preferred_element_type=jnp.float32)                  # (Bblk, L, L)
    m = jnp.max(s, axis=-1, keepdims=True)
    e = jnp.exp(s - m)
    p = e * pl.reciprocal(jnp.sum(e, axis=-1, keepdims=True), approx=True)

    out = jnp.einsum('bqk,bkd->bqd', p.astype(jnp.bfloat16), v,
                     preferred_element_type=jnp.float32)                # (Bblk, L, D)

    # Classified_Layer on VPU/XLU (N=1 MXU matmuls would waste the systolic array):
    #   attn   = out @ W_a^T + b_a             -> (Bblk, L, 1)
    #   pooled = sum(out * attn, axis=seq)     -> (Bblk, D)
    #   result = sigmoid(pooled @ W_f^T + b_f) -> (Bblk, 1)
    wa = cls_w_ref[0:1, :].reshape(1, 1, d)
    wf = cls_w_ref[1:2, :]
    attn = jnp.sum(out * wa, axis=-1, keepdims=True) + cls_b_ref[0]
    pooled = jnp.sum(out * attn, axis=1)                                # (Bblk, D)
    logit = jnp.sum(pooled * wf, axis=-1, keepdims=True) + cls_b_ref[1]
    sig = pl.reciprocal(1.0 + jnp.exp(-logit), approx=True)             # sigmoid
    o_ref[...] = sig.reshape(bblk, 1, 1)


def _pick_batch_block(B, L, Din, D, budget_bytes=12 << 20):
    """Largest batch block whose per-row intermediates fit a conservative VMEM
    budget (safe against v7x's 64 MiB VMEM / v5e's 16 MiB default scoped limit)."""
    per_row = (4 * (3 * L * D + 2 * L * L + L * D)        # f32 qkv / scores / out
               + 2 * (2 * L * Din + 3 * L * D + L * L))   # bf16 x (dbl-buf) & casts
    cap = max(1, budget_bytes // max(per_row, 1))
    if cap >= B:
        return B
    # Prefer sublane-friendly (multiple-of-8) divisors; any divisor is still legal
    # because the last two block dims of every operand equal the full array dims.
    divisors = [c for c in range(min(cap, B), 0, -1) if B % c == 0]
    for c in divisors:
        if c % 8 == 0:
            return c
    return divisors[0] if divisors else 1


def self_attention_layer(x, wq, wk, wv, w_attn, b_attn, w_fc, b_fc,
                         *, muti_head_num, hidden_dim):
    """x: (B, L, Din) float32. wq/wk/wv: (Din, D) head-concatenated weights.
    w_attn/w_fc: PyTorch Linear(D, 1) weights of shape (1, D); b_*: shape (1,).
    Returns (B, 1) float32 sigmoid outputs, matching the PyTorch module."""
    B, L, Din = x.shape
    D = muti_head_num * hidden_dim
    scale = 1.0 / math.sqrt(D)

    # Fold 1/sqrt(D) into WQ (one tiny weight-sized mul, done on the host) and fuse
    # [WQ|WK|WV] into one (Din, 3D) bf16 operand -> single wide MXU matmul + one DMA.
    wqkv = jnp.concatenate(
        [jnp.asarray(wq, jnp.float32) * scale,
         jnp.asarray(wk, jnp.float32),
         jnp.asarray(wv, jnp.float32)], axis=1).astype(jnp.bfloat16)     # (Din, 3D)
    x_bf = x.astype(jnp.bfloat16)

    # Fuse the two classifier Linear(D,1) weights / biases into single operands.
    cls_w = jnp.concatenate(
        [jnp.asarray(w_attn, jnp.float32).reshape(1, D),
         jnp.asarray(w_fc, jnp.float32).reshape(1, D)], axis=0)          # (2, D)
    cls_b = jnp.concatenate(
        [jnp.asarray(b_attn, jnp.float32).reshape(1),
         jnp.asarray(b_fc, jnp.float32).reshape(1)], axis=0)             # (2,)

    Bblk = _pick_batch_block(B, L, Din, D)
    grid = (B // Bblk,)

    kernel = functools.partial(_self_attn_kernel, d=D)

    out = pl.pallas_call(
        kernel,
        out_shape=jax.ShapeDtypeStruct((B, 1, 1), jnp.float32),
        grid_spec=pltpu.PrefetchScalarGridSpec(
            num_scalar_prefetch=0,
            grid=grid,
            in_specs=[
                pl.BlockSpec((Bblk, L, Din), lambda b: (b, 0, 0)),   # X batch block
                pl.BlockSpec((Din, 3 * D), lambda b: (0, 0)),        # fused [WQ|WK|WV]
                pl.BlockSpec((2, D), lambda b: (0, 0)),              # [W_attn; W_fc]
                pl.BlockSpec(memory_space=pltpu.MemorySpace.SMEM),   # [b_attn, b_fc]
            ],
            out_specs=pl.BlockSpec((Bblk, 1, 1), lambda b: (b, 0, 0)),
        ),
        compiler_params=pltpu.CompilerParams(
            dimension_semantics=("parallel",),   # batch blocks shard across v7x's 2 TCs
            vmem_limit_bytes=48 << 20,           # headroom beyond 32 MiB scoped default
        ),
    )(x_bf, wqkv, cls_w, cls_b)
    return out.reshape(B, 1)


def _xavier_uniform(key, fan_in, fan_out):
    bound = math.sqrt(6.0 / (fan_in + fan_out))
    return jax.random.uniform(key, (fan_in, fan_out), jnp.float32, -bound, bound)


def _linear_init(key, fan_in, fan_out):
    # PyTorch nn.Linear default init: U(-1/sqrt(fan_in), 1/sqrt(fan_in)); weight (out, in).
    kw, kb = jax.random.split(key)
    bound = 1.0 / math.sqrt(fan_in)
    w = jax.random.uniform(kw, (fan_out, fan_in), jnp.float32, -bound, bound)
    b = jax.random.uniform(kb, (fan_out,), jnp.float32, -bound, bound)
    return w, b


if __name__ == "__main__":
    # Small, forward-consistent shapes
    batch, seq_len = 2, 8
    input_dim, hidden_dim, muti_head_num = 4, 32, 2
    D = muti_head_num * hidden_dim

    root = jax.random.PRNGKey(0)
    keys = jax.random.split(root, 3 * muti_head_num + 3)

    # Per-head xavier_uniform weights, concatenated along the hidden axis
    wq = jnp.concatenate(
        [_xavier_uniform(keys[i], input_dim, hidden_dim) for i in range(muti_head_num)], axis=1)
    wk = jnp.concatenate(
        [_xavier_uniform(keys[muti_head_num + i], input_dim, hidden_dim)
         for i in range(muti_head_num)], axis=1)
    wv = jnp.concatenate(
        [_xavier_uniform(keys[2 * muti_head_num + i], input_dim, hidden_dim)
         for i in range(muti_head_num)], axis=1)

    # attention_weight: Linear(D, 1); fc: Linear(D, 1)
    w_attn, b_attn = _linear_init(keys[-3], D, 1)
    w_fc, b_fc = _linear_init(keys[-2], D, 1)

    x = jax.random.normal(keys[-1], (batch, seq_len, input_dim), jnp.float32)

    out = self_attention_layer(
        x, wq, wk, wv, w_attn, b_attn, w_fc, b_fc,
        muti_head_num=muti_head_num, hidden_dim=hidden_dim)
    out = jax.block_until_ready(out)

    assert out.shape == (batch, 1)
    assert bool(jnp.all(jnp.isfinite(out)))
    print("KERNEL_OK")
</pallas_src>

<mosaic_0001>
module attributes {stable_mosaic.version = 11 : i64} {
  func.func @_self_attn_kernel(%arg0: i32, %arg1: memref<2x8x4xbf16, #tpu.memory_space<vmem>>, %arg2: memref<4x192xbf16, #tpu.memory_space<vmem>>, %arg3: memref<2x64xf32, #tpu.memory_space<vmem>>, %arg4: memref<2xf32, #tpu.memory_space<smem>>, %arg5: memref<2x1x1xf32, #tpu.memory_space<vmem>>) attributes {dimension_semantics = [#tpu.dimension_semantics<parallel>], iteration_bounds = array<i64: 1>, scalar_prefetch = 0 : i64, scratch_operands = 0 : i64, tpu.core_type = #tpu.core_type<tc>, window_params = [{transform_indices = @transform_0, window_bounds = array<i64: 2, 8, 4>}, {pipeline_mode = #tpu.pipeline_mode<synchronous>, transform_indices = @transform_1, window_bounds = array<i64: 4, 192>}, {pipeline_mode = #tpu.pipeline_mode<synchronous>, transform_indices = @transform_2, window_bounds = array<i64: 2, 64>}, {transform_indices = @transform_3, window_bounds = array<i64: 2>}, {transform_indices = @transform_4, window_bounds = array<i64: 2, 1, 1>}]} {
    %c0 = arith.constant 0 : index
    %c0_0 = arith.constant 0 : index
    %c0_1 = arith.constant 0 : index
    %0 = vector.load %arg1[%c0, %c0_0, %c0_1] : memref<2x8x4xbf16, #tpu.memory_space<vmem>>, vector<2x8x4xbf16>
    %1 = vector.shape_cast %0 : vector<2x8x4xbf16> to vector<16x4xbf16>
    %c0_2 = arith.constant 0 : index
    %c0_3 = arith.constant 0 : index
    %2 = vector.load %arg2[%c0_2, %c0_3] : memref<4x192xbf16, #tpu.memory_space<vmem>>, vector<4x192xbf16>
    %cst = arith.constant dense<0.000000e+00> : vector<16x192xf32>
    %3 = tpu.matmul %1, %2, %cst {dimension_numbers = #tpu.dot_dimension_numbers<[1], [0], [0], [1], [0, 0, 1, 1], [], []>} : vector<16x4xbf16>, vector<4x192xbf16>, vector<16x192xf32> -> vector<16x192xf32>
    %4 = vector.shape_cast %3 : vector<16x192xf32> to vector<2x8x192xf32>
    %5 = vector.extract_strided_slice %4 {offsets = [0, 0, 0], sizes = [2, 8, 64], strides = [1, 1, 1]} : vector<2x8x192xf32> to vector<2x8x64xf32>
    %6 = arith.truncf %5 : vector<2x8x64xf32> to vector<2x8x64xbf16>
    %7 = vector.extract_strided_slice %4 {offsets = [0, 0, 64], sizes = [2, 8, 64], strides = [1, 1, 1]} : vector<2x8x192xf32> to vector<2x8x64xf32>
    %8 = arith.truncf %7 : vector<2x8x64xf32> to vector<2x8x64xbf16>
    %9 = vector.extract_strided_slice %4 {offsets = [0, 0, 128], sizes = [2, 8, 64], strides = [1, 1, 1]} : vector<2x8x192xf32> to vector<2x8x64xf32>
    %10 = arith.truncf %9 : vector<2x8x64xf32> to vector<2x8x64xbf16>
    "tpu.trace_start"() <{level = 10 : i32, message = "bqd,bkd->bqk"}> : () -> ()
    %cst_4 = arith.constant dense<0.000000e+00> : vector<2x8x8xf32>
    %11 = tpu.matmul %6, %8, %cst_4 {dimension_numbers = #tpu.dot_dimension_numbers<[2], [2], [1], [1], [0, 0, 0, 1, 1, 1], [0], [0]>} : vector<2x8x64xbf16>, vector<2x8x64xbf16>, vector<2x8x8xf32> -> vector<2x8x8xf32>
    "tpu.trace_stop"() : () -> ()
    %cst_5 = arith.constant dense<0xFF800000> : vector<2x8xf32>
    %12 = vector.multi_reduction <maximumf>, %11, %cst_5 [2] : vector<2x8x8xf32> to vector<2x8xf32>
    %13 = vector.shape_cast %12 : vector<2x8xf32> to vector<2x8x1xf32>
    %14 = vector.broadcast %13 : vector<2x8x1xf32> to vector<2x8x8xf32>
    %15 = arith.subf %11, %14 : vector<2x8x8xf32>
    %16 = math.exp %15 : vector<2x8x8xf32>
    %cst_6 = arith.constant dense<0.000000e+00> : vector<2x8xf32>
    %17 = vector.multi_reduction <add>, %16, %cst_6 [2] : vector<2x8x8xf32> to vector<2x8xf32>
    %18 = vector.shape_cast %17 : vector<2x8xf32> to vector<2x8x1xf32>
    %19 = tpu.reciprocal %18 {approx = true} : vector<2x8x1xf32> -> vector<2x8x1xf32>
    %20 = vector.broadcast %19 : vector<2x8x1xf32> to vector<2x8x8xf32>
    %21 = arith.mulf %16, %20 : vector<2x8x8xf32>
    %22 = arith.truncf %21 : vector<2x8x8xf32> to vector<2x8x8xbf16>
    "tpu.trace_start"() <{level = 10 : i32, message = "bqk,bkd->bqd"}> : () -> ()
    %cst_7 = arith.constant dense<0.000000e+00> : vector<2x8x64xf32>
    %23 = tpu.matmul %22, %10, %cst_7 {dimension_numbers = #tpu.dot_dimension_numbers<[2], [1], [1], [2], [0, 0, 0, 1, 1, 2], [0], [0]>} : vector<2x8x8xbf16>, vector<2x8x64xbf16>, vector<2x8x64xf32> -> vector<2x8x64xf32>
    "tpu.trace_stop"() : () -> ()
    %c0_8 = arith.constant 0 : index
    %c0_9 = arith.constant 0 : index
    %24 = vector.load %arg3[%c0_8, %c0_9] : memref<2x64xf32, #tpu.memory_space<vmem>>, vector<1x64xf32>
    %25 = vector.shape_cast %24 : vector<1x64xf32> to vector<1x1x64xf32>
    %c1 = arith.constant 1 : index
    %c0_10 = arith.constant 0 : index
    %26 = vector.load %arg3[%c1, %c0_10] : memref<2x64xf32, #tpu.memory_space<vmem>>, vector<1x64xf32>
    %27 = vector.broadcast %25 : vector<1x1x64xf32> to vector<2x8x64xf32>
    %28 = arith.mulf %23, %27 : vector<2x8x64xf32>
    %cst_11 = arith.constant dense<0.000000e+00> : vector<2x8xf32>
    %29 = vector.multi_reduction <add>, %28, %cst_11 [2] : vector<2x8x64xf32> to vector<2x8xf32>
    %30 = vector.shape_cast %29 : vector<2x8xf32> to vector<2x8x1xf32>
    %c0_12 = arith.constant 0 : index
    %31 = memref.load %arg4[%c0_12] : memref<2xf32, #tpu.memory_space<smem>>
    %32 = vector.broadcast %31 : f32 to vector<2x8x1xf32>
    %33 = arith.addf %30, %32 : vector<2x8x1xf32>
    %34 = vector.broadcast %33 : vector<2x8x1xf32> to vector<2x8x64xf32>
    %35 = arith.mulf %23, %34 : vector<2x8x64xf32>
    %cst_13 = arith.constant dense<0.000000e+00> : vector<2x64xf32>
    %36 = vector.multi_reduction <add>, %35, %cst_13 [1] : vector<2x8x64xf32> to vector<2x64xf32>
    %37 = vector.broadcast %26 : vector<1x64xf32> to vector<2x64xf32>
    %38 = arith.mulf %36, %37 : vector<2x64xf32>
    %cst_14 = arith.constant dense<0.000000e+00> : vector<2xf32>
    %39 = vector.multi_reduction <add>, %38, %cst_14 [1] : vector<2x64xf32> to vector<2xf32>
    %40 = vector.shape_cast %39 : vector<2xf32> to vector<2x1xf32>
    %c1_15 = arith.constant 1 : index
    %41 = memref.load %arg4[%c1_15] : memref<2xf32, #tpu.memory_space<smem>>
    %42 = vector.broadcast %41 : f32 to vector<2x1xf32>
    %43 = arith.addf %40, %42 : vector<2x1xf32>
    %cst_16 = arith.constant 0.000000e+00 : f32
    %44 = vector.broadcast %cst_16 : f32 to vector<2x1xf32>
    %45 = arith.subf %44, %43 : vector<2x1xf32>
    %46 = math.exp %45 : vector<2x1xf32>
    %cst_17 = arith.constant 1.000000e+00 : f32
    %47 = vector.broadcast %cst_17 : f32 to vector<2x1xf32>
    %48 = arith.addf %47, %46 : vector<2x1xf32>
    %49 = tpu.reciprocal %48 {approx = true} : vector<2x1xf32> -> vector<2x1xf32>
    %50 = vector.shape_cast %49 : vector<2x1xf32> to vector<2x1x1xf32>
    %c0_18 = arith.constant 0 : index
    %c0_19 = arith.constant 0 : index
    %c0_20 = arith.constant 0 : index
    %51 = vector.load %arg5[%c0_18, %c0_19, %c0_20] : memref<2x1x1xf32, #tpu.memory_space<vmem>>, vector<2x1x1xf32>
    tpu.vector_store %arg5[%c0_18, %c0_19, %c0_20], %50 {strides = array<i32>} : memref<2x1x1xf32, #tpu.memory_space<vmem>>, vector<2x1x1xf32>,
    return
  }
  func.func @transform_0(%arg0: i32) -> (i32, i32, i32) {
    %c0_i32 = arith.constant 0 : i32
    %c0_i32_0 = arith.constant 0 : i32
    %c0_i32_1 = arith.constant 0 : i32
    return %arg0, %c0_i32, %c0_i32_0 : i32, i32, i32
  }
  func.func @transform_1(%arg0: i32) -> (i32, i32) {
    %c0_i32 = arith.constant 0 : i32
    %c0_i32_0 = arith.constant 0 : i32
    %c0_i32_1 = arith.constant 0 : i32
    return %c0_i32, %c0_i32_0 : i32, i32
  }
  func.func @transform_2(%arg0: i32) -> (i32, i32) {
    %c0_i32 = arith.constant 0 : i32
    %c0_i32_0 = arith.constant 0 : i32
    %c0_i32_1 = arith.constant 0 : i32
    return %c0_i32, %c0_i32_0 : i32, i32
  }
  func.func @transform_3(%arg0: i32) -> i32 {
    %c0_i32 = arith.constant 0 : i32
    %c0_i32_0 = arith.constant 0 : i32
    return %c0_i32 : i32
  }
  func.func @transform_4(%arg0: i32) -> (i32, i32, i32) {
    %c0_i32 = arith.constant 0 : i32
    %c0_i32_0 = arith.constant 0 : i32
    %c0_i32_1 = arith.constant 0 : i32
    return %arg0, %c0_i32, %c0_i32_0 : i32, i32, i32
  }
}

</mosaic_0001>

<llo_original>
// kernel: tpu_custom_call.1
$region0: #{tpu_custom_call.1}
  #allocation0 [shape = 'u32[]', space=smem, size = 0x4, offset = 0x4, fixed_abs, tag = 'smem constant byte address 0x4 - core index']
  #allocation1 [shape = 'u32[144,128]{1,0:T(1,128)}', space=vmem, size = 0x12000, scoped, tag = 'internal scratch']
  %s0 = inlined_call_operand.vmem [shape: bf16[2,8,4], index: 0, kind: input, shape index: {}]
  %s1 = inlined_call_operand.vmem [shape: bf16[4,192], index: 1, kind: input, shape index: {}]
  %s2 = inlined_call_operand.vmem [shape: f32[2,64], index: 2, kind: input, shape index: {}]
  %s3 = inlined_call_operand.vmem [shape: f32[2], index: 3, kind: input, shape index: {}]
  %s4 = inlined_call_operand.vmem [shape: f32[2,1,1], index: 4, kind: output, shape index: {}]
  %s5 = sld [smem:[#allocation0]]
  $region30: #{tpu_custom_call.1} parent=0
    _
  %s7 = ssub.s32 1, %s5
  %s8 = scalar_select 0, %s7, %s5
  $region1: #{tpu_custom_call.1} parent=0
    #allocation2 [shape = 'u8[512]{0}', space=smem, size = 0x200, scoped, tag = 'input window, operand 3, single buffered']
    #allocation3 [shape = 's32[1]{0}', space=sflag, size = 0x4, scoped, tag = 'scoped memory for tpu_custom_call.1']
    %9 = vsyncpa [#allocation3], 0
    // Predicated region
    $region2: #{tpu_custom_call.1} parent=1 // pred_check
      _
    $region3: #{tpu_custom_call.1} parent=1 // pred_check_branch
      %11 = sbr.rel (0) target = $region5
    $region4: #{tpu_custom_call.1} parent=1 // pred_region
      _
    $region5: #{tpu_custom_call.1} parent=1 // pred_fallthru
      _
    // Predicated region
    $region6: #{tpu_custom_call.1} parent=1 // pred_check
      _
    $region7: #{tpu_custom_call.1} parent=1 // pred_check_branch
      %13 = sbr.rel (0) target = $region9
    $region8: #{tpu_custom_call.1} parent=1 // pred_region
      _
    $region9: #{tpu_custom_call.1} parent=1 // pred_fallthru
      _
    // Predicated region
    $region10: #{tpu_custom_call.1} parent=1 // pred_check
      _
    $region11: #{tpu_custom_call.1} parent=1 // pred_check_branch
      %15 = sbr.rel (0) target = $region13
    $region12: #{tpu_custom_call.1} parent=1 // pred_region
      _
    $region13: #{tpu_custom_call.1} parent=1 // pred_fallthru
      _
    // Predicated region
    $region14: #{tpu_custom_call.1} parent=1 // pred_check
      _
    $region15: #{tpu_custom_call.1} parent=1 // pred_check_branch
      %17 = sbr.rel (0) target = $region17
    $region16: #{tpu_custom_call.1} parent=1 // pred_region
      %s19 = ssub.s32 16, 16
      %20 = vsyncadd [#allocation3], %s19
      %s22 = sshll.u32 %s3, 4
      %s23 = int_to_ptr.vmem [resolvable:$true] %s22
      %25 = dma.vmem_to_smem %s23, 16, [#allocation2], [#allocation3]
    $region17: #{tpu_custom_call.1} parent=1 // pred_fallthru
      _
    // Predicated region
    $region18: #{tpu_custom_call.1} parent=1 // pred_check
      _
    $region19: #{tpu_custom_call.1} parent=1 // pred_check_branch
      %27 = sbr.rel (0) target = $region21
    $region20: #{tpu_custom_call.1} parent=1 // pred_region
      %28 = dma.done [#allocation3], 16
    $region21: #{tpu_custom_call.1} parent=1 // pred_fallthru
      _
    %29 = sfence
    %v31 = vld [vmem:[%s0] sm:$0xf]
    %v32 = vld [vmem:[%s0 + $0x4] sm:$0xf]
    %v33 = vld [vmem:[%s1] sm:$0xf]
    %v36 = vunpack.c.l.b16 %v31
    %v37 = vunpack.c.l.b16 %v32
    %v38 = vpack.c.b16 %v37, %v36
    %v41 = vunpack.c.l.s4 1983009808
    %v42 = vunpack.c.0.s8 %v41
    %v43 = vlaneseq
    %v44 = vshrl.u32 %v43, 7
    %v45 = vsub.s32 %v42, %v44
    %v46 = vrot.slane %v33, %v45
    %v47 = vcombine.high %v46, %v46
    %vm48 = vcmask 31744
    %v50 = vsel %vm48, %v38, 0
    %vm52 = vcmask 1041408
    %v54 = vsel %vm52, %v46, 0
    %v57 = vsel %vm52, %v47, 0
    %59 = vmatprep.subr.bf16.mxu0 0
    %60 = vmatpush1.bf16.msra.mxu0 0
    %61 = vmatprep.subr.bf16.mxu0 0
    %62 = vmatpush1.bf16.msra.mxu0 0
    %63 = vmatprep.subr.bf16.mxu0 0
    %64 = vmatpush1.bf16.msra.mxu0 0
    %65 = vmatprep.subr.bf16.mxu0 0
    %66 = vmatpush1.bf16.msra.mxu0 0
    %67 = vmatprep.subr.bf16.mxu0 0
    %68 = vmatpush1.bf16.msra.mxu0 0
    %69 = vmatprep.subr.bf16.mxu0 0
    %70 = vmatpush1.bf16.msra.mxu0 0
    %71 = vmatprep.subr.bf16.mxu0 0
    %72 = vmatpush1.bf16.msra.mxu0 0
    %73 = vmatprep.subr.bf16.mxu0 %v57
    %74 = vmatpush1.bf16.msra.mxu0 %v54
    %75 = vmatprep.subr.bf16.mxu0 0
    %76 = vmatpush2.bf16.msra.mxu0 0
    %77 = vmatprep.subr.bf16.mxu0 0
    %78 = vmatpush2.bf16.msra.mxu0 0
    %79 = vmatprep.subr.bf16.mxu0 0
    %80 = vmatpush2.bf16.msra.mxu0 0
    %81 = vmatprep.subr.bf16.mxu0 0
    %82 = vmatpush2.bf16.msra.mxu0 0
    %83 = vmatprep.subr.bf16.mxu0 0
    %84 = vmatpush2.bf16.msra.mxu0 0
    %85 = vmatprep.subr.bf16.mxu0 0
    %86 = vmatpush2.bf16.msra.mxu0 0
    %87 = vmatprep.subr.bf16.mxu0 0
    %88 = vmatpush2.bf16.msra.mxu0 0
    %89 = vmatprep.subr.bf16.mxu0 0
    %90 = vmatpush2.bf16.msra.mxu0 0
    %91 = vmatprep.mubr.bf16.mxu0 0
    %92 = vmatmul.mubr.bf16.gmra.mxu0 %v50
    %v93 = vpop.f32.mrf.mxu0
    %v94 = vadd.f32 0.0, %v93
    %v95 = vpop.f32.mrf.mxu0
    %v96 = vadd.f32 0.0, %v95
    %v97 = vpop.f32.mrf.mxu0
    %v98 = vadd.f32 0.0, %v97
    %v99 = vpop.f32.mrf.mxu0
    %v100 = vadd.f32 0.0, %v99
    %101 = vdwg.mxu0
    %v102 = vpack.c.bf16 %v94, %v94
    %v103 = vpack.c.bf16 %v98, %v98
    %v104 = vpack.c.bf16 %v96, %v96
    %v105 = vpack.c.bf16 %v100, %v100
    %107 = vrot.lane.b32.xlu0 %v102, 64
    %v108 = vpop.permute.xlu0 %107
    %vm109 = vcmask 523264
    %v111 = vsel %vm109, %v102, 0
    %v114 = vsel %vm109, %v108, 0
    %116 = vmatprep.subr.bf16.mxu0 0
    %117 = vmatpush1.bf16.xpose.msra.mxu0 0
    %118 = vmatprep.subr.bf16.mxu0 0
    %119 = vmatpush1.bf16.xpose.msra.mxu0 0
    %120 = vmatprep.subr.bf16.mxu0 0
    %121 = vmatpush1.bf16.xpose.msra.mxu0 0
    %122 = vmatprep.subr.bf16.mxu0 0
    %123 = vmatpush1.bf16.xpose.msra.mxu0 0
    %124 = vmatprep.subr.bf16.mxu0 0
    %125 = vmatpush1.bf16.xpose.msra.mxu0 0
    %126 = vmatprep.subr.bf16.mxu0 0
    %127 = vmatpush1.bf16.xpose.msra.mxu0 0
    %128 = vmatprep.subr.bf16.mxu0 0
    %129 = vmatpush1.bf16.xpose.msra.mxu0 0
    %130 = vmatprep.subr.bf16.mxu0 0
    %131 = vmatpush1.bf16.xpose.msra.mxu0 %v114
    %132 = vmatprep.subr.bf16.mxu0 0
    %133 = vmatpush2.bf16.xpose.msra.mxu0 0
    %134 = vmatprep.subr.bf16.mxu0 0
    %135 = vmatpush2.bf16.xpose.msra.mxu0 0
    %136 = vmatprep.subr.bf16.mxu0 0
    %137 = vmatpush2.bf16.xpose.msra.mxu0 0
    %138 = vmatprep.subr.bf16.mxu0 0
    %139 = vmatpush2.bf16.xpose.msra.mxu0 0
    %140 = vmatprep.subr.bf16.mxu0 0
    %141 = vmatpush2.bf16.xpose.msra.mxu0 0
    %142 = vmatprep.subr.bf16.mxu0 0
    %143 = vmatpush2.bf16.xpose.msra.mxu0 0
    %144 = vmatprep.subr.bf16.mxu0 0
    %145 = vmatpush2.bf16.xpose.msra.mxu0 0
    %146 = vmatprep.subr.bf16.mxu0 0
    %147 = vmatpush2.bf16.xpose.msra.mxu0 0
    %148 = vmatprep.mubr.bf16.mxu0 0
    %149 = vmatmul.mubr.bf16.gmra.mxu0 %v111
    %v150 = vpop.f32.mrf.mxu0
    %v151 = vadd.f32 0.0, %v150
    %v152 = vpop.f32.mrf.mxu0
    %v153 = vpop.f32.mrf.mxu0
    %v154 = vpop.f32.mrf.mxu0
    %155 = vdwg.mxu0
    %157 = vrot.lane.b32.xlu0 %v103, 64
    %v158 = vpop.permute.xlu0 %157
    %v160 = vsel %vm109, %v103, 0
    %v163 = vsel %vm109, %v158, 0
    %165 = vmatprep.subr.bf16.mxu0 0
    %166 = vmatpush1.bf16.xpose.msra.mxu0 0
    %167 = vmatprep.subr.bf16.mxu0 0
    %168 = vmatpush1.bf16.xpose.msra.mxu0 0
    %169 = vmatprep.subr.bf16.mxu0 0
    %170 = vmatpush1.bf16.xpose.msra.mxu0 0
    %171 = vmatprep.subr.bf16.mxu0 0
    %172 = vmatpush1.bf16.xpose.msra.mxu0 0
    %173 = vmatprep.subr.bf16.mxu0 0
    %174 = vmatpush1.bf16.xpose.msra.mxu0 0
    %175 = vmatprep.subr.bf16.mxu0 0
    %176 = vmatpush1.bf16.xpose.msra.mxu0 0
    %177 = vmatprep.subr.bf16.mxu0 0
    %178 = vmatpush1.bf16.xpose.msra.mxu0 0
    %179 = vmatprep.subr.bf16.mxu0 0
    %180 = vmatpush1.bf16.xpose.msra.mxu0 %v163
    %181 = vmatprep.subr.bf16.mxu0 0
    %182 = vmatpush2.bf16.xpose.msra.mxu0 0
    %183 = vmatprep.subr.bf16.mxu0 0
    %184 = vmatpush2.bf16.xpose.msra.mxu0 0
    %185 = vmatprep.subr.bf16.mxu0 0
    %186 = vmatpush2.bf16.xpose.msra.mxu0 0
    %187 = vmatprep.subr.bf16.mxu0 0
    %188 = vmatpush2.bf16.xpose.msra.mxu0 0
    %189 = vmatprep.subr.bf16.mxu0 0
    %190 = vmatpush2.bf16.xpose.msra.mxu0 0
    %191 = vmatprep.subr.bf16.mxu0 0
    %192 = vmatpush2.bf16.xpose.msra.mxu0 0
    %193 = vmatprep.subr.bf16.mxu0 0
    %194 = vmatpush2.bf16.xpose.msra.mxu0 0
    %195 = vmatprep.subr.bf16.mxu0 0
    %196 = vmatpush2.bf16.xpose.msra.mxu0 0
    %197 = vmatprep.mubr.bf16.mxu0 0
    %198 = vmatmul.mubr.bf16.gmra.mxu0 %v160
    %v199 = vpop.f32.mrf.mxu0
    %v200 = vadd.f32 0.0, %v199
    %v201 = vpop.f32.mrf.mxu0
    %v202 = vpop.f32.mrf.mxu0
    %v203 = vpop.f32.mrf.mxu0
    %204 = vdwg.mxu0
    %vm205 = vcmask 64512
    %v206 = vsel %vm205, %v151, -inf
    %207 = vmax.xlane.f32.xlu0 %v206
    %v208 = vpop.xlane.xlu0 %207
    %v209 = vsel %vm205, %v200, -inf
    %210 = vmax.xlane.f32.xlu0 %v209
    %v211 = vpop.xlane.xlu0 %210
    %v212 = vsub.f32 %v151, %v208
    %v213 = vsub.f32 %v200, %v211
    %v214 = vmul.f32 %v212, 1.442695
    %v215 = vpow.pop %v214
    %v216 = vmul.f32 %v213, 1.442695
    %v217 = vpow.pop %v216
    %v218 = vsel %vm205, %v215, 0.0
    %219 = vadd.xlane.f32.xlu0 %v218
    %v220 = vpop.xlane.xlu0 %219
    %v221 = vsel %vm205, %v217, 0.0
    %222 = vadd.xlane.f32.xlu0 %v221
    %v223 = vpop.xlane.xlu0 %222
    %v224 = vrcp.pop %v220
    %v225 = vrcp.pop %v223
    %v226 = vmul.f32 %v215, %v224
    %v227 = vmul.f32 %v217, %v225
    %v228 = vpack.c.bf16 %v226, %v226
    %v229 = vpack.c.bf16 %v227, %v227
    %v231 = vsel %vm205, %v228, 0
    %vm233 = vcmask 1043456
    %v235 = vsel %vm233, %v104, 0
    %237 = vmatprep.subr.bf16.mxu0 0
    %238 = vmatpush1.bf16.msra.mxu0 0
    %239 = vmatprep.subr.bf16.mxu0 0
    %240 = vmatpush1.bf16.msra.mxu0 0
    %241 = vmatprep.subr.bf16.mxu0 0
    %242 = vmatpush1.bf16.msra.mxu0 0
    %243 = vmatprep.subr.bf16.mxu0 0
    %244 = vmatpush1.bf16.msra.mxu0 0
    %245 = vmatprep.subr.bf16.mxu0 0
    %246 = vmatpush1.bf16.msra.mxu0 0
    %247 = vmatprep.subr.bf16.mxu0 0
    %248 = vmatpush1.bf16.msra.mxu0 0
    %249 = vmatprep.subr.bf16.mxu0 0
    %250 = vmatpush1.bf16.msra.mxu0 0
    %251 = vmatprep.subr.bf16.mxu0 0
    %252 = vmatpush1.bf16.msra.mxu0 %v235
    %253 = vmatprep.subr.bf16.mxu0 0
    %254 = vmatpush2.bf16.msra.mxu0 0
    %255 = vmatprep.subr.bf16.mxu0 0
    %256 = vmatpush2.bf16.msra.mxu0 0
    %257 = vmatprep.subr.bf16.mxu0 0
    %258 = vmatpush2.bf16.msra.mxu0 0
    %259 = vmatprep.subr.bf16.mxu0 0
    %260 = vmatpush2.bf16.msra.mxu0 0
    %261 = vmatprep.subr.bf16.mxu0 0
    %262 = vmatpush2.bf16.msra.mxu0 0
    %263 = vmatprep.subr.bf16.mxu0 0
    %264 = vmatpush2.bf16.msra.mxu0 0
    %265 = vmatprep.subr.bf16.mxu0 0
    %266 = vmatpush2.bf16.msra.mxu0 0
    %267 = vmatprep.subr.bf16.mxu0 0
    %268 = vmatpush2.bf16.msra.mxu0 0
    %269 = vmatprep.mubr.bf16.mxu0 0
    %270 = vmatmul.mubr.bf16.gmra.mxu0 %v231
    %v271 = vpop.f32.mrf.mxu0
    %v272 = vadd.f32 0.0, %v271
    %v273 = vpop.f32.mrf.mxu0
    %v274 = vpop.f32.mrf.mxu0
    %v275 = vpop.f32.mrf.mxu0
    %276 = vdwg.mxu0
    %v278 = vsel %vm205, %v229, 0
    %v281 = vsel %vm233, %v105, 0
    %283 = vmatprep.subr.bf16.mxu0 0
    %284 = vmatpush1.bf16.msra.mxu0 0
    %285 = vmatprep.subr.bf16.mxu0 0
    %286 = vmatpush1.bf16.msra.mxu0 0
    %287 = vmatprep.subr.bf16.mxu0 0
    %288 = vmatpush1.bf16.msra.mxu0 0
    %289 = vmatprep.subr.bf16.mxu0 0
    %290 = vmatpush1.bf16.msra.mxu0 0
    %291 = vmatprep.subr.bf16.mxu0 0
    %292 = vmatpush1.bf16.msra.mxu0 0
    %293 = vmatprep.subr.bf16.mxu0 0
    %294 = vmatpush1.bf16.msra.mxu0 0
    %295 = vmatprep.subr.bf16.mxu0 0
    %296 = vmatpush1.bf16.msra.mxu0 0
    %297 = vmatprep.subr.bf16.mxu0 0
    %298 = vmatpush1.bf16.msra.mxu0 %v281
    %299 = vmatprep.subr.bf16.mxu0 0
    %300 = vmatpush2.bf16.msra.mxu0 0
    %301 = vmatprep.subr.bf16.mxu0 0
    %302 = vmatpush2.bf16.msra.mxu0 0
    %303 = vmatprep.subr.bf16.mxu0 0
    %304 = vmatpush2.bf16.msra.mxu0 0
    %305 = vmatprep.subr.bf16.mxu0 0
    %306 = vmatpush2.bf16.msra.mxu0 0
    %307 = vmatprep.subr.bf16.mxu0 0
    %308 = vmatpush2.bf16.msra.mxu0 0
    %309 = vmatprep.subr.bf16.mxu0 0
    %310 = vmatpush2.bf16.msra.mxu0 0
    %311 = vmatprep.subr.bf16.mxu0 0
    %312 = vmatpush2.bf16.msra.mxu0 0
    %313 = vmatprep.subr.bf16.mxu0 0
    %314 = vmatpush2.bf16.msra.mxu0 0
    %315 = vmatprep.mubr.bf16.mxu0 0
    %316 = vmatmul.mubr.bf16.gmra.mxu0 %v278
    %v317 = vpop.f32.mrf.mxu0
    %v318 = vadd.f32 0.0, %v317
    %v319 = vpop.f32.mrf.mxu0
    %v320 = vpop.f32.mrf.mxu0
    %v321 = vpop.f32.mrf.mxu0
    %322 = vdwg.mxu0
    %v323 = vld [vmem:[%s2] sm:$0x1]
    %v324 = vld [vmem:[%s2 + $0x1] sm:$0x1]
    %v325 = vlaneseq
    %v326 = vshrl.u32 %v325, 7
    %v327 = vsub.s32 0, %v326
    %v328 = vrot.slane %v323, %v327
    %v329 = vmul.f32 %v272, %v328
    %v330 = vmul.f32 %v318, %v328
    %v331 = vsel %vm109, %v329, 0.0
    %332 = vadd.xlane.f32.xlu0 %v331
    %v333 = vpop.xlane.xlu0 %332
    %v334 = vsel %vm109, %v330, 0.0
    %335 = vadd.xlane.f32.xlu0 %v334
    %v336 = vpop.xlane.xlu0 %335
    %s337 = sld [smem:[#allocation2]]
    %v338 = vstv %s337
    %v339 = vadd.f32 %v333, %v338
    %v340 = vadd.f32 %v336, %v338
    %v341 = vmul.f32 %v272, %v339
    %v342 = vmul.f32 %v318, %v340
    %v343 = vsel %vm109, %v341, 0.0
    %v344 = vrot.slane %v343, 4
    %v345 = vadd.f32 %v343, %v344
    %v346 = vrot.slane %v345, 2
    %v347 = vadd.f32 %v345, %v346
    %v348 = vrot.slane %v347, 1
    %v349 = vadd.f32 %v347, %v348
    %v350 = vsel %vm109, %v342, 0.0
    %v351 = vrot.slane %v350, 4
    %v352 = vadd.f32 %v350, %v351
    %v353 = vrot.slane %v352, 2
    %v354 = vadd.f32 %v352, %v353
    %v355 = vrot.slane %v354, 1
    %v356 = vadd.f32 %v354, %v355
    %v357 = vlaneseq
    %v358 = vshrl.u32 %v357, 7
    %v359 = vsub.s32 0, %v358
    %v360 = vrot.slane %v324, %v359
    %v361 = vmul.f32 %v349, %v360
    %v362 = vmul.f32 %v356, %v360
    %v365 = vrot.slane %v362, 7
    %vm366 = vcmask 1041409
    %v367 = vsel %vm366, %v365, %v361
    %vm369 = vcmask 517120
    %v370 = vsel %vm369, %v367, 0.0
    %371 = vadd.xlane.f32.xlu0 %v370
    %v372 = vpop.xlane.xlu0 %371
    %s373 = sld [smem:[#allocation2 + $0x1]]
    %v374 = vstv %s373
    %v375 = vadd.f32 %v372, %v374
    %v376 = vsub.f32 0.0, %v375
    %v377 = vmul.f32 %v376, 1.442695
    %v378 = vpow.pop %v377
    %v379 = vadd.f32 %v378, 1.0
    %v380 = vrcp.pop %v379
    %v382 = vlaneseq
    %v383 = vshrl.u32 %v382, 7
    %v384 = vsub.s32 0, %v383
    %v385 = vrot.slane %v380, %v384
    %v386 = vlaneseq
    %v387 = vshrl.u32 %v386, 7
    %v388 = vsub.s32 1, %v387
    %v389 = vrot.slane %v380, %v388
    %vm392 = vcmask 0
    %393 = vst.msk [vmem:[%s4] sm:$0x1] %vm392, %v385
    %394 = vst.msk [vmem:[%s4 + $0x1] sm:$0x1] %vm392, %v389
    // Predicated region
    $region22: #{tpu_custom_call.1} parent=1 // pred_check
      _
    $region23: #{tpu_custom_call.1} parent=1 // pred_check_branch
      %396 = sbr.rel (0) target = $region25
    $region24: #{tpu_custom_call.1} parent=1 // pred_region
      _
    $region25: #{tpu_custom_call.1} parent=1 // pred_fallthru
      _
    // Predicated region
    $region26: #{tpu_custom_call.1} parent=1 // pred_check
      _
    $region27: #{tpu_custom_call.1} parent=1 // pred_check_branch
      %398 = sbr.rel (0) target = $region29
    $region28: #{tpu_custom_call.1} parent=1 // pred_region
      _
    $region29: #{tpu_custom_call.1} parent=1 // pred_fallthru
      _
    %399 = vsyncpa [#allocation3], 1

</llo_original>
